<compile_context>
chip_gen: v5e
topology: v5e:2x2
jax: 0.10.0
libtpu: 0.0.40
codegen_flags: <defaults>
</compile_context>

<pallas_src>
import jax
import jax.numpy as jnp
from jax.experimental import pallas as pl
from jax.experimental.pallas import tpu as pltpu

_LANES = 128
_SUBLANES = 8
_SMALL_N_THRESHOLD = 65536


def _logreg_kernel(wb_ref, x_ref, o_ref):
    # wb_ref: (2,) f32 in SMEM -> [w00, b0].  x_ref/o_ref: (tm, 128) f32 VMEM.
    w = wb_ref[0]
    b = wb_ref[1]
    y = x_ref[...] * w + b                      # Linear(1, 1): broadcast VPU FMA
    # sigmoid(y) = 0.5 * tanh(0.5 * y) + 0.5 : one EUP op per vreg, exact in f32
    o_ref[...] = 0.5 * jnp.tanh(0.5 * y) + 0.5


def logistic_regression_pallas(x, w, b, *, tm=1024):
    """Pallas path. x: (N, 1) f32, w: (1, 1), b: (1,) -> (N, 1) sigmoid(x @ W.T + b)."""
    n = x.shape[0]
    flat = x.reshape(-1).astype(jnp.float32)    # in_features == 1 -> (N,)

    # Lane-dense slab (rows, 128); rows padded only to a sublane multiple of 8.
    rows = pl.cdiv(n, _LANES)
    rows_p = ((rows + _SUBLANES - 1) // _SUBLANES) * _SUBLANES
    total = rows_p * _LANES

    padded = total != n
    if padded:                                  # fast path skips the pad copy
        flat = jnp.pad(flat, (0, total - n))
    x2d = flat.reshape(rows_p, _LANES)

    # Tile selection: default 1024 rows (2 MiB of double-buffers, fits v5e/v6e/v7x
    # scoped VMEM), capped at the padded row count, and halved when there is
    # enough work so the grid has >= 2 steps for v7x dual-TensorCore sharding.
    tm = min(tm, rows_p)
    if rows_p >= 2 * _SUBLANES:
        half = (((rows_p + 1) // 2) + _SUBLANES - 1) // _SUBLANES * _SUBLANES
        tm = min(tm, half)
    tm = max(_SUBLANES, (tm // _SUBLANES) * _SUBLANES)
    grid = (pl.cdiv(rows_p, tm),)

    # Single SMEM operand holding both parameters.
    wb = jnp.concatenate([w.reshape(1), b.reshape(1)]).astype(jnp.float32)

    out2d = pl.pallas_call(
        _logreg_kernel,
        out_shape=jax.ShapeDtypeStruct((rows_p, _LANES), jnp.float32),
        grid_spec=pltpu.PrefetchScalarGridSpec(
            num_scalar_prefetch=0,
            grid=grid,
            in_specs=[
                pl.BlockSpec(memory_space=pltpu.MemorySpace.SMEM),  # [w, b]
                pl.BlockSpec((tm, _LANES), lambda i: (i, 0)),       # x tile
            ],
            out_specs=pl.BlockSpec((tm, _LANES), lambda i: (i, 0)),
        ),
        compiler_params=pltpu.CompilerParams(
            dimension_semantics=("parallel",)),
        cost_estimate=pl.CostEstimate(
            flops=4 * total,            # FMA + tanh->sigmoid combine
            transcendentals=total,      # one tanh per element
            bytes_accessed=8 * total),  # 4 B read + 4 B write per element
    )(wb, x2d)

    if not padded:                              # no-pad fast path: no slice copy
        return out2d.reshape(n, 1)
    return out2d.reshape(-1)[:n].reshape(n, 1)


def logistic_regression(x, w, b):
    """Dispatcher: tiny batches stay in fused plain JAX (pallas_call launch +
    pad/slice overhead dominates); large batches stream through the kernel."""
    if x.shape[0] < _SMALL_N_THRESHOLD:
        return jax.nn.sigmoid(
            x.astype(jnp.float32) * w.reshape(()) + b.reshape(()))
    return logistic_regression_pallas(x, w, b)


if __name__ == "__main__":
    key = jax.random.PRNGKey(0)
    kw, kb = jax.random.split(key, 2)

    # Input consistent with the module spec: x = np.linspace(1, 10, 200) -> (200, 1)
    batch = 200
    x = jnp.linspace(1.0, 10.0, batch, dtype=jnp.float32).reshape(batch, 1)

    # nn.Linear(1, 1) parameter shapes: W (1, 1), b (1,)
    w = jax.random.normal(kw, (1, 1), dtype=jnp.float32) * 0.5
    b = jax.random.normal(kb, (1,), dtype=jnp.float32) * 0.1

    ref = jax.nn.sigmoid(x @ w.T + b)

    # 1) Exercise the Pallas kernel directly on the module's workload.
    out = logistic_regression_pallas(x, w, b)
    jax.block_until_ready(out)
    assert out.shape == (batch, 1)
    assert jnp.allclose(out, ref, atol=1e-5), "kernel mismatch vs reference"

    # 2) Exercise the no-pad / multi-block path (N % 1024 == 0 -> >= 2 grid steps).
    n2 = 4096
    x2 = jax.random.normal(jax.random.PRNGKey(1), (n2, 1), dtype=jnp.float32)
    out2 = logistic_regression_pallas(x2, w, b)
    jax.block_until_ready(out2)
    ref2 = jax.nn.sigmoid(x2 @ w.T + b)
    assert jnp.allclose(out2, ref2, atol=1e-5), "multi-block kernel mismatch"

    # 3) Dispatcher fast path (plain JAX for tiny N).
    out3 = logistic_regression(x, w, b)
    jax.block_until_ready(out3)
    assert jnp.allclose(out3, ref, atol=1e-5), "dispatcher mismatch"

    print("KERNEL_OK")
</pallas_src>

<mosaic_0001>
module attributes {stable_mosaic.version = 11 : i64} {
  func.func @_logreg_kernel(%arg0: i32, %arg1: memref<2xf32, #tpu.memory_space<smem>>, %arg2: memref<8x128xf32, #tpu.memory_space<vmem>>, %arg3: memref<8x128xf32, #tpu.memory_space<vmem>>) attributes {dimension_semantics = [#tpu.dimension_semantics<parallel>], iteration_bounds = array<i64: 1>, scalar_prefetch = 0 : i64, scratch_operands = 0 : i64, tpu.core_type = #tpu.core_type<tc>, window_params = [{transform_indices = @transform_0, window_bounds = array<i64: 2>}, {transform_indices = @transform_1, window_bounds = array<i64: 8, 128>}, {transform_indices = @transform_2, window_bounds = array<i64: 8, 128>}]} {
    %c0 = arith.constant 0 : index
    %0 = memref.load %arg1[%c0] : memref<2xf32, #tpu.memory_space<smem>>
    %c1 = arith.constant 1 : index
    %1 = memref.load %arg1[%c1] : memref<2xf32, #tpu.memory_space<smem>>
    %c0_0 = arith.constant 0 : index
    %c0_1 = arith.constant 0 : index
    %2 = vector.load %arg2[%c0_0, %c0_1] : memref<8x128xf32, #tpu.memory_space<vmem>>, vector<8x128xf32>
    %3 = vector.broadcast %0 : f32 to vector<8x128xf32>
    %4 = arith.mulf %2, %3 : vector<8x128xf32>
    %5 = vector.broadcast %1 : f32 to vector<8x128xf32>
    %6 = arith.addf %4, %5 : vector<8x128xf32>
    %cst = arith.constant 5.000000e-01 : f32
    %7 = vector.broadcast %cst : f32 to vector<8x128xf32>
    %8 = arith.mulf %7, %6 : vector<8x128xf32>
    %9 = math.tanh %8 : vector<8x128xf32>
    %cst_2 = arith.constant 5.000000e-01 : f32
    %10 = vector.broadcast %cst_2 : f32 to vector<8x128xf32>
    %11 = arith.mulf %10, %9 : vector<8x128xf32>
    %cst_3 = arith.constant 5.000000e-01 : f32
    %12 = vector.broadcast %cst_3 : f32 to vector<8x128xf32>
    %13 = arith.addf %11, %12 : vector<8x128xf32>
    %c0_4 = arith.constant 0 : index
    %c0_5 = arith.constant 0 : index
    %14 = vector.load %arg3[%c0_4, %c0_5] : memref<8x128xf32, #tpu.memory_space<vmem>>, vector<8x128xf32>
    tpu.vector_store %arg3[%c0_4, %c0_5], %13 {strides = array<i32>} : memref<8x128xf32, #tpu.memory_space<vmem>>, vector<8x128xf32>,
    return
  }
  func.func @transform_0(%arg0: i32) -> i32 {
    %c0_i32 = arith.constant 0 : i32
    %c0_i32_0 = arith.constant 0 : i32
    return %c0_i32 : i32
  }
  func.func @transform_1(%arg0: i32) -> (i32, i32) {
    %c0_i32 = arith.constant 0 : i32
    %c0_i32_0 = arith.constant 0 : i32
    return %arg0, %c0_i32 : i32, i32
  }
  func.func @transform_2(%arg0: i32) -> (i32, i32) {
    %c0_i32 = arith.constant 0 : i32
    %c0_i32_0 = arith.constant 0 : i32
    return %arg0, %c0_i32 : i32, i32
  }
}

</mosaic_0001>

<llo_original>
// kernel: tpu_custom_call.1
$region0: #{tpu_custom_call.1}
  #allocation0 [shape = 'u32[]', space=smem, size = 0x4, offset = 0x4, fixed_abs, tag = 'smem constant byte address 0x4 - core index']
  #allocation1 [shape = 'u32[72,128]{1,0:T(1,128)}', space=vmem, size = 0x9000, scoped, tag = 'internal scratch']
  %s0 = inlined_call_operand.hbm [shape: f32[2], index: 0, kind: input, shape index: {}]
  %s1 = inlined_call_operand.hbm [shape: f32[8,128], index: 1, kind: input, shape index: {}]
  %s2 = inlined_call_operand.hbm [shape: f32[8,128], index: 2, kind: output, shape index: {}]
  %s3 = sld [smem:[#allocation0]]
  $region26: #{tpu_custom_call.1} parent=0
    _
  %s5 = ssub.s32 1, %s3
  %s6 = scalar_select 0, %s5, %s3
  $region1: #{tpu_custom_call.1} parent=0
    #allocation2 [shape = 'u8[512]{0}', space=smem, size = 0x200, scoped, tag = 'input window, operand 0, single buffered']
    #allocation3 [shape = 's32[1]{0}', space=sflag, size = 0x4, scoped, tag = 'scoped memory for tpu_custom_call.1']
    #allocation4 [shape = 's32[1]{0}', space=sflag, size = 0x4, scoped, tag = 'scoped memory for tpu_custom_call.1']
    #allocation5 [shape = 's32[1]{0}', space=sflag, size = 0x4, scoped, tag = 'scoped memory for tpu_custom_call.1']
    #allocation6 [shape = 'u8[4096]{0}', space=vmem, size = 0x1000, scoped, tag = 'input window, operand 1, single buffered']
    #allocation7 [shape = 'u8[4096]{0}', space=vmem, size = 0x1000, scoped, tag = 'output window, operand 0, single buffered']
    %7 = vsyncpa [#allocation5], 0
    %8 = vsyncpa [#allocation3], 0
    %9 = vsyncpa [#allocation4], 0
    // Predicated region
    $region2: #{tpu_custom_call.1} parent=1 // pred_check
      _
    $region3: #{tpu_custom_call.1} parent=1 // pred_check_branch
      %11 = sbr.rel (0) target = $region5
    $region4: #{tpu_custom_call.1} parent=1 // pred_region
      %13 = vsyncadd [#allocation5], 0
      %s15 = sshll.u32 %s0, 4
      %s16 = int_to_ptr.hbm [resolvable:$true] %s15
      %18 = dma.hbm_to_smem %s16, 16, [#allocation2], [#allocation5]
    $region5: #{tpu_custom_call.1} parent=1 // pred_fallthru
      _
    // Predicated region
    $region6: #{tpu_custom_call.1} parent=1 // pred_check
      _
    $region7: #{tpu_custom_call.1} parent=1 // pred_check_branch
      %20 = sbr.rel (0) target = $region9
    $region8: #{tpu_custom_call.1} parent=1 // pred_region
      %22 = vsyncadd [#allocation3], 0
      %s24 = sshll.u32 %s1, 4
      %s25 = int_to_ptr.hbm [resolvable:$true] %s24
      %s26 = sshll.u32 [#allocation6], 4
      %s27 = int_to_ptr.vmem [resolvable:$true] %s26
      %29 = dma.hbm_to_vmem [thread:$0]  %s25, 128, %s27, [#allocation3]
    $region9: #{tpu_custom_call.1} parent=1 // pred_fallthru
      _
    // Predicated region
    $region10: #{tpu_custom_call.1} parent=1 // pred_check
      _
    $region11: #{tpu_custom_call.1} parent=1 // pred_check_branch
      %31 = sbr.rel (0) target = $region13
    $region12: #{tpu_custom_call.1} parent=1 // pred_region
      %33 = dma.done [#allocation5], 16
    $region13: #{tpu_custom_call.1} parent=1 // pred_fallthru
      _
    // Predicated region
    $region14: #{tpu_custom_call.1} parent=1 // pred_check
      _
    $region15: #{tpu_custom_call.1} parent=1 // pred_check_branch
      %35 = sbr.rel (0) target = $region17
    $region16: #{tpu_custom_call.1} parent=1 // pred_region
      %37 = dma.done [#allocation3], 128
    $region17: #{tpu_custom_call.1} parent=1 // pred_fallthru
      _
    %38 = sfence
    %s39 = sld [smem:[#allocation2]]
    %s40 = sld [smem:[#allocation2 + $0x1]]
    %v41 = vld [vmem:[#allocation6] sm:$0xff]
    %v42 = vstv %s39
    %v43 = vmul.f32 %v41, %v42
    %v44 = vstv %s40
    %v45 = vadd.f32 %v43, %v44
    %v46 = vmul.f32 %v45, 0.5
    %v47 = vtanh.pop %v46
    %v48 = vmul.f32 %v47, 0.5
    %v49 = vadd.f32 %v48, 0.5
    %50 = vst [vmem:[#allocation7] sm:$0xff] %v49
    // Predicated region
    $region18: #{tpu_custom_call.1} parent=1 // pred_check
      _
    $region19: #{tpu_custom_call.1} parent=1 // pred_check_branch
      %52 = sbr.rel (0) target = $region21
    $region20: #{tpu_custom_call.1} parent=1 // pred_region
      %54 = vsyncadd [#allocation4], 0
      %s56 = sshll.u32 [#allocation7], 4
      %s57 = int_to_ptr.vmem [resolvable:$true] %s56
      %s58 = sshll.u32 %s2, 4
      %s59 = int_to_ptr.hbm [resolvable:$true] %s58
      %61 = dma.vmem_to_hbm [thread:$0]  %s57, 128, %s59, [#allocation4]
    $region21: #{tpu_custom_call.1} parent=1 // pred_fallthru
      _
    // Predicated region
    $region22: #{tpu_custom_call.1} parent=1 // pred_check
      _
    $region23: #{tpu_custom_call.1} parent=1 // pred_check_branch
      %63 = sbr.rel (0) target = $region25
    $region24: #{tpu_custom_call.1} parent=1 // pred_region
      %65 = dma.done [#allocation4], 128
    $region25: #{tpu_custom_call.1} parent=1 // pred_fallthru
      _
    %66 = vsyncpa [#allocation3], 1
    %67 = vsyncpa [#allocation4], 1
    %68 = vsyncpa [#allocation5], 1

</llo_original>
